<compile_context>
chip_gen: v5e
topology: v5e:2x2
jax: 0.10.0
libtpu: 0.0.40
codegen_flags: <defaults>
</compile_context>

<pallas_src>
import math

import jax
import jax.numpy as jnp
from jax.experimental import pallas as pl
from jax.experimental.pallas import tpu as pltpu

HIDDEN1 = 128
HIDDEN2 = 64
MAX_TILE_B = 4096                    # batch-tile cap (K is small -> a few MiB per tile)
VMEM_BUDGET = 24 * 1024 * 1024       # conservative per-kernel VMEM budget (fits all chips)


def _round_up(n, m):
    return ((n + m - 1) // m) * m


def _choose_tiling(B, K):
    """Adaptive batch tiling: balanced tiles, minimal padding, even #grid steps (v7x)."""
    # Per-row VMEM estimate (f32, lane-padded to 128): double-buffered x tile +
    # double-buffered out tile + h1/h2 intermediates.
    bytes_per_row = 2 * _round_up(K, 128) * 4 + 4 * 128 * 4
    cap = max(8, min(MAX_TILE_B, (VMEM_BUDGET // bytes_per_row) // 8 * 8))
    num_tiles = pl.cdiv(B, cap)
    if num_tiles % 2:
        num_tiles += 1               # >= 2 and even -> both v7x TensorCores stay busy
    tile_b = _round_up(pl.cdiv(B, num_tiles), 8)
    return tile_b, num_tiles * tile_b, num_tiles


def mlp_kernel(x_ref, w1_ref, b1_ref, w2_ref, b2_ref, w3_ref, b3_ref, o_ref):
    # Dropout(0.2) layers are identity in eval mode.
    x = x_ref[...].astype(jnp.bfloat16)            # f32 HBM read, cast on the VPU in-kernel
    h1 = jnp.dot(x, w1_ref[...], preferred_element_type=jnp.float32) + b1_ref[...]
    h1 = jnp.maximum(h1, 0.0)                      # ReLU
    h2 = jnp.dot(h1.astype(jnp.bfloat16), w2_ref[...],
                 preferred_element_type=jnp.float32) + b2_ref[...]
    h2 = jnp.maximum(h2, 0.0)                      # ReLU
    # Final layer at true num_classes width: only useful logits are written to HBM.
    o_ref[...] = jnp.dot(h2.astype(jnp.bfloat16), w3_ref[...],
                         preferred_element_type=jnp.float32) + b3_ref[...]


def prepare_params(params):
    """One-time weight prep (hoisted out of the per-call path): bf16 weights, f32 biases."""
    w1, b1, w2, b2, w3, b3 = params
    return (w1.astype(jnp.bfloat16), b1,
            w2.astype(jnp.bfloat16), b2,
            w3.astype(jnp.bfloat16), b3)


def mlp_forward(x, prepared_params):
    w1, b1, w2, b2, w3, b3 = prepared_params
    B, K = x.shape
    num_classes = w3.shape[1]

    tile_b, b_pad, num_tiles = _choose_tiling(B, K)
    if b_pad != B:
        x = jnp.pad(x, ((0, b_pad - B), (0, 0)))   # at most a few rows of padding

    out = pl.pallas_call(
        mlp_kernel,
        out_shape=jax.ShapeDtypeStruct((b_pad, num_classes), jnp.float32),
        grid=(num_tiles,),
        in_specs=[
            pl.BlockSpec((tile_b, K), lambda i: (i, 0)),             # x tile (f32)
            pl.BlockSpec((K, HIDDEN1), lambda i: (0, 0)),            # w1 (resident, bf16)
            pl.BlockSpec((1, HIDDEN1), lambda i: (0, 0)),            # b1 (resident, f32)
            pl.BlockSpec((HIDDEN1, HIDDEN2), lambda i: (0, 0)),      # w2 (resident, bf16)
            pl.BlockSpec((1, HIDDEN2), lambda i: (0, 0)),            # b2 (resident, f32)
            pl.BlockSpec((HIDDEN2, num_classes), lambda i: (0, 0)),  # w3 (resident, bf16)
            pl.BlockSpec((1, num_classes), lambda i: (0, 0)),        # b3 (resident, f32)
        ],
        out_specs=pl.BlockSpec((tile_b, num_classes), lambda i: (i, 0)),
        compiler_params=pltpu.CompilerParams(
            dimension_semantics=("parallel",),       # batch tiles are independent
            vmem_limit_bytes=32 * 1024 * 1024,       # load-bearing on v5e (16 MiB default)
        ),
    )(x, w1, b1, w2, b2, w3, b3)

    return out[:B] if b_pad != B else out


def init_params(key, input_size, num_classes=3):
    """Deterministic init mimicking PyTorch nn.Linear default (U(-1/sqrt(fan_in), +))."""
    dims = [(input_size, HIDDEN1), (HIDDEN1, HIDDEN2), (HIDDEN2, num_classes)]
    params = []
    for i, (fan_in, fan_out) in enumerate(dims):
        kw, kb = jax.random.split(jax.random.fold_in(key, i))
        bound = 1.0 / math.sqrt(fan_in)
        w = jax.random.uniform(kw, (fan_in, fan_out), jnp.float32, -bound, bound)
        b = jax.random.uniform(kb, (1, fan_out), jnp.float32, -bound, bound)
        params += [w, b]
    return tuple(params)


def reference_forward(x, params):
    w1, b1, w2, b2, w3, b3 = params
    p = jax.lax.Precision.HIGHEST
    h1 = jnp.maximum(jnp.dot(x, w1, precision=p) + b1, 0.0)
    h2 = jnp.maximum(jnp.dot(h1, w2, precision=p) + b2, 0.0)
    return jnp.dot(h2, w3, precision=p) + b3


if __name__ == "__main__":
    key = jax.random.PRNGKey(0)
    input_size, num_classes = 32, 3
    params = init_params(jax.random.fold_in(key, 123), input_size, num_classes)
    prepared = prepare_params(params)        # one-time weight prep (bf16 casts)
    fwd = jax.jit(mlp_forward)

    # Small demo shape (2 tiny balanced tiles).
    batch = 8
    x = jax.random.normal(jax.random.fold_in(key, 456), (batch, input_size), jnp.float32)
    out = jax.block_until_ready(fwd(x, prepared))
    ref = reference_forward(x, params)
    assert out.shape == (batch, num_classes)
    # bf16 weights/activations vs f32 reference -> intentional accuracy trade, loose tol.
    assert jnp.allclose(out, ref, atol=3e-2, rtol=3e-2)

    # Larger batch exercising the adaptive multi-tile grid (2 balanced tiles of 600 rows,
    # zero batch padding).
    batch2 = 1200
    x2 = jax.random.normal(jax.random.fold_in(key, 789), (batch2, input_size), jnp.float32)
    out2 = jax.block_until_ready(fwd(x2, prepared))
    ref2 = reference_forward(x2, params)
    assert out2.shape == (batch2, num_classes)
    assert jnp.allclose(out2, ref2, atol=3e-2, rtol=3e-2)

    print("KERNEL_OK")
</pallas_src>

<mosaic_0001>
module attributes {stable_mosaic.version = 11 : i64} {
  func.func @mlp_kernel(%arg0: i32, %arg1: memref<8x32xf32, #tpu.memory_space<vmem>>, %arg2: memref<32x128xbf16, #tpu.memory_space<vmem>>, %arg3: memref<1x128xf32, #tpu.memory_space<vmem>>, %arg4: memref<128x64xbf16, #tpu.memory_space<vmem>>, %arg5: memref<1x64xf32, #tpu.memory_space<vmem>>, %arg6: memref<64x3xbf16, #tpu.memory_space<vmem>>, %arg7: memref<1x3xf32, #tpu.memory_space<vmem>>, %arg8: memref<8x3xf32, #tpu.memory_space<vmem>>) attributes {dimension_semantics = [#tpu.dimension_semantics<parallel>], iteration_bounds = array<i64: 2>, scalar_prefetch = 0 : i64, scratch_operands = 0 : i64, tpu.core_type = #tpu.core_type<tc>, window_params = [{transform_indices = @transform_0, window_bounds = array<i64: 8, 32>}, {pipeline_mode = #tpu.pipeline_mode<synchronous>, transform_indices = @transform_1, window_bounds = array<i64: 32, 128>}, {pipeline_mode = #tpu.pipeline_mode<synchronous>, transform_indices = @transform_2, window_bounds = array<i64: 1, 128>}, {pipeline_mode = #tpu.pipeline_mode<synchronous>, transform_indices = @transform_3, window_bounds = array<i64: 128, 64>}, {pipeline_mode = #tpu.pipeline_mode<synchronous>, transform_indices = @transform_4, window_bounds = array<i64: 1, 64>}, {pipeline_mode = #tpu.pipeline_mode<synchronous>, transform_indices = @transform_5, window_bounds = array<i64: 64, 3>}, {pipeline_mode = #tpu.pipeline_mode<synchronous>, transform_indices = @transform_6, window_bounds = array<i64: 1, 3>}, {transform_indices = @transform_7, window_bounds = array<i64: 8, 3>}]} {
    %c0 = arith.constant 0 : index
    %c0_0 = arith.constant 0 : index
    %0 = vector.load %arg1[%c0, %c0_0] : memref<8x32xf32, #tpu.memory_space<vmem>>, vector<8x32xf32>
    %1 = arith.truncf %0 : vector<8x32xf32> to vector<8x32xbf16>
    %c0_1 = arith.constant 0 : index
    %c0_2 = arith.constant 0 : index
    %2 = vector.load %arg2[%c0_1, %c0_2] : memref<32x128xbf16, #tpu.memory_space<vmem>>, vector<32x128xbf16>
    %cst = arith.constant dense<0.000000e+00> : vector<8x128xf32>
    %3 = tpu.matmul %1, %2, %cst {dimension_numbers = #tpu.dot_dimension_numbers<[1], [0], [0], [1], [0, 0, 1, 1], [], []>} : vector<8x32xbf16>, vector<32x128xbf16>, vector<8x128xf32> -> vector<8x128xf32>
    %c0_3 = arith.constant 0 : index
    %c0_4 = arith.constant 0 : index
    %4 = vector.load %arg3[%c0_3, %c0_4] : memref<1x128xf32, #tpu.memory_space<vmem>>, vector<1x128xf32>
    %5 = vector.broadcast %4 : vector<1x128xf32> to vector<8x128xf32>
    %6 = arith.addf %3, %5 : vector<8x128xf32>
    %cst_5 = arith.constant 0.000000e+00 : f32
    %7 = vector.broadcast %cst_5 : f32 to vector<8x128xf32>
    %8 = arith.maximumf %6, %7 : vector<8x128xf32>
    %9 = arith.truncf %8 : vector<8x128xf32> to vector<8x128xbf16>
    %c0_6 = arith.constant 0 : index
    %c0_7 = arith.constant 0 : index
    %10 = vector.load %arg4[%c0_6, %c0_7] : memref<128x64xbf16, #tpu.memory_space<vmem>>, vector<128x64xbf16>
    %cst_8 = arith.constant dense<0.000000e+00> : vector<8x64xf32>
    %11 = tpu.matmul %9, %10, %cst_8 {dimension_numbers = #tpu.dot_dimension_numbers<[1], [0], [0], [1], [0, 0, 1, 1], [], []>} : vector<8x128xbf16>, vector<128x64xbf16>, vector<8x64xf32> -> vector<8x64xf32>
    %c0_9 = arith.constant 0 : index
    %c0_10 = arith.constant 0 : index
    %12 = vector.load %arg5[%c0_9, %c0_10] : memref<1x64xf32, #tpu.memory_space<vmem>>, vector<1x64xf32>
    %13 = vector.broadcast %12 : vector<1x64xf32> to vector<8x64xf32>
    %14 = arith.addf %11, %13 : vector<8x64xf32>
    %cst_11 = arith.constant 0.000000e+00 : f32
    %15 = vector.broadcast %cst_11 : f32 to vector<8x64xf32>
    %16 = arith.maximumf %14, %15 : vector<8x64xf32>
    %17 = arith.truncf %16 : vector<8x64xf32> to vector<8x64xbf16>
    %c0_12 = arith.constant 0 : index
    %c0_13 = arith.constant 0 : index
    %18 = vector.load %arg6[%c0_12, %c0_13] : memref<64x3xbf16, #tpu.memory_space<vmem>>, vector<64x3xbf16>
    %cst_14 = arith.constant dense<0.000000e+00> : vector<8x3xf32>
    %19 = tpu.matmul %17, %18, %cst_14 {dimension_numbers = #tpu.dot_dimension_numbers<[1], [0], [0], [1], [0, 0, 1, 1], [], []>} : vector<8x64xbf16>, vector<64x3xbf16>, vector<8x3xf32> -> vector<8x3xf32>
    %c0_15 = arith.constant 0 : index
    %c0_16 = arith.constant 0 : index
    %20 = vector.load %arg7[%c0_15, %c0_16] : memref<1x3xf32, #tpu.memory_space<vmem>>, vector<1x3xf32>
    %21 = vector.broadcast %20 : vector<1x3xf32> to vector<8x3xf32>
    %22 = arith.addf %19, %21 : vector<8x3xf32>
    %c0_17 = arith.constant 0 : index
    %c0_18 = arith.constant 0 : index
    %23 = vector.load %arg8[%c0_17, %c0_18] : memref<8x3xf32, #tpu.memory_space<vmem>>, vector<8x3xf32>
    tpu.vector_store %arg8[%c0_17, %c0_18], %22 {strides = array<i32>} : memref<8x3xf32, #tpu.memory_space<vmem>>, vector<8x3xf32>,
    return
  }
  func.func @transform_0(%arg0: i32) -> (i32, i32) {
    %c0_i32 = arith.constant 0 : i32
    %c0_i32_0 = arith.constant 0 : i32
    return %arg0, %c0_i32 : i32, i32
  }
  func.func @transform_1(%arg0: i32) -> (i32, i32) {
    %c0_i32 = arith.constant 0 : i32
    %c0_i32_0 = arith.constant 0 : i32
    %c0_i32_1 = arith.constant 0 : i32
    return %c0_i32, %c0_i32_0 : i32, i32
  }
  func.func @transform_2(%arg0: i32) -> (i32, i32) {
    %c0_i32 = arith.constant 0 : i32
    %c0_i32_0 = arith.constant 0 : i32
    %c0_i32_1 = arith.constant 0 : i32
    return %c0_i32, %c0_i32_0 : i32, i32
  }
  func.func @transform_3(%arg0: i32) -> (i32, i32) {
    %c0_i32 = arith.constant 0 : i32
    %c0_i32_0 = arith.constant 0 : i32
    %c0_i32_1 = arith.constant 0 : i32
    return %c0_i32, %c0_i32_0 : i32, i32
  }
  func.func @transform_4(%arg0: i32) -> (i32, i32) {
    %c0_i32 = arith.constant 0 : i32
    %c0_i32_0 = arith.constant 0 : i32
    %c0_i32_1 = arith.constant 0 : i32
    return %c0_i32, %c0_i32_0 : i32, i32
  }
  func.func @transform_5(%arg0: i32) -> (i32, i32) {
    %c0_i32 = arith.constant 0 : i32
    %c0_i32_0 = arith.constant 0 : i32
    %c0_i32_1 = arith.constant 0 : i32
    return %c0_i32, %c0_i32_0 : i32, i32
  }
  func.func @transform_6(%arg0: i32) -> (i32, i32) {
    %c0_i32 = arith.constant 0 : i32
    %c0_i32_0 = arith.constant 0 : i32
    %c0_i32_1 = arith.constant 0 : i32
    return %c0_i32, %c0_i32_0 : i32, i32
  }
  func.func @transform_7(%arg0: i32) -> (i32, i32) {
    %c0_i32 = arith.constant 0 : i32
    %c0_i32_0 = arith.constant 0 : i32
    return %arg0, %c0_i32 : i32, i32
  }
}

</mosaic_0001>

<llo_original>
// kernel: mlp_forward.1
$region0: #{mlp_forward.1}
  #allocation0 [shape = 'u32[]', space=smem, size = 0x4, offset = 0x4, fixed_abs, tag = 'smem constant byte address 0x4 - core index']
  #allocation1 [shape = 'u32[72,128]{1,0:T(1,128)}', space=vmem, size = 0x9000, scoped, tag = 'internal scratch']
  %s0 = inlined_call_operand.vmem [shape: f32[16,32], index: 0, kind: input, shape index: {}]
  %s1 = inlined_call_operand.vmem [shape: bf16[32,128], index: 1, kind: input, shape index: {}]
  %s2 = inlined_call_operand.vmem [shape: f32[1,128], index: 2, kind: input, shape index: {}]
  %s3 = inlined_call_operand.vmem [shape: bf16[128,64], index: 3, kind: input, shape index: {}]
  %s4 = inlined_call_operand.vmem [shape: f32[1,64], index: 4, kind: input, shape index: {}]
  %s5 = inlined_call_operand.vmem [shape: bf16[64,3], index: 5, kind: input, shape index: {}]
  %s6 = inlined_call_operand.vmem [shape: f32[1,3], index: 6, kind: input, shape index: {}]
  %s7 = inlined_call_operand.vmem [shape: f32[16,3], index: 7, kind: output, shape index: {}]
  %s8 = sld [smem:[#allocation0]]
  $region61: #{mlp_forward.1} parent=0
    _
  %s10 = ssub.s32 1, %s8
  %s11 = scalar_select 0, %s10, %s8
  loop: start=0, step=1, limit=4
  $region2: #{mlp_forward.1} parent=0 // loop_pre_header
    _
  $region3: #{mlp_forward.1} parent=0 // loop_header
    %s13 = sphi 0, %s17
    %p14 = scmp.ge.s32.totalorder %s13, 4
    %s23 = sphi 0, %s25
    %s26 = sphi 0, %s23
    %s27 = sphi 0, %s26
    %s43 = sphi 0, %s27
    %s47 = sphi 0, %s47
    %s49 = sphi 0, %s47
    %s50 = sphi 0, %s49
    %s64 = sphi 0, %s50
    %s68 = sphi 0, %s68
    %s70 = sphi 0, %s68
    %s71 = sphi 0, %s70
    %s85 = sphi 0, %s71
    %s89 = sphi 0, %s89
    %s91 = sphi 0, %s89
    %s92 = sphi 0, %s91
    %s106 = sphi 0, %s92
    %s110 = sphi 0, %s110
    %s112 = sphi 0, %s110
    %s113 = sphi 0, %s112
    %s127 = sphi 0, %s113
    %s131 = sphi 0, %s131
    %s133 = sphi 0, %s131
    %s134 = sphi 0, %s133
    %s148 = sphi 0, %s134
    %s152 = sphi 0, %s152
    %s154 = sphi 0, %s152
    %s155 = sphi 0, %s154
    %s169 = sphi 0, %s155
    %s175 = sphi 0, %s177
    %s178 = sphi 0, %s175
    %s179 = sphi 0, %s178
    %s195 = sphi 0, %s179
  $region4: #{mlp_forward.1} parent=0 // loop_header_branch
    %16 = sbr.rel (%p14) target = $region8
  $region5: #{mlp_forward.1} parent=0 // loop_body
    %s18 = ssub.s32 %s13, 1
    %s19 = ssub.s32 %s13, 2
    %s20 = sadd.s32 %s13, 1
    %s21 = ssub.s32 %s13, %s20
    %p22 = scmp.eq.s32.totalorder %s21, 0
    %s24 = sadd.s32 %s23, 1
    %s25 = scalar_select %p22, %s23, %s24
    %p28 = pneg %p22
    %p29 = scmp.eq.s32.totalorder %s13, 1
    %p30 = por %p28, %p29
    %p31 = scmp.ne.s32.totalorder %s23, %s26
    %p32 = scmp.eq.s32.totalorder %s13, 0
    %p33 = por %p31, %p32
    %p34 = scmp.ne.s32.totalorder %s23, %s26
    %p35 = scmp.eq.s32.totalorder %s18, 1
    %p36 = por %p34, %p35
    %p37 = scmp.ne.s32.totalorder %s26, %s27
    %p38 = scmp.eq.s32.totalorder %s18, 0
    %p39 = por %p37, %p38
    %p40 = scmp.ne.s32.totalorder %s26, %s27
    %p41 = scmp.eq.s32.totalorder %s19, 1
    %p42 = por %p40, %p41
    %p44 = scmp.ne.s32.totalorder %s27, %s43
    %p45 = scmp.eq.s32.totalorder %s19, 0
    %p46 = por %p44, %p45
    %s48 = sadd.s32 %s47, 1
    %p51 = scmp.eq.s32.totalorder %s13, 1
    %p52 = scmp.ne.s32.totalorder %s47, %s49
    %p53 = scmp.eq.s32.totalorder %s13, 0
    %p54 = por %p52, %p53
    %p55 = scmp.ne.s32.totalorder %s47, %s49
    %p56 = scmp.eq.s32.totalorder %s18, 1
    %p57 = por %p55, %p56
    %p58 = scmp.ne.s32.totalorder %s49, %s50
    %p59 = scmp.eq.s32.totalorder %s18, 0
    %p60 = por %p58, %p59
    %p61 = scmp.ne.s32.totalorder %s49, %s50
    %p62 = scmp.eq.s32.totalorder %s19, 1
    %p63 = por %p61, %p62
    %p65 = scmp.ne.s32.totalorder %s50, %s64
    %p66 = scmp.eq.s32.totalorder %s19, 0
    %p67 = por %p65, %p66
    %s69 = sadd.s32 %s68, 1
    %p72 = scmp.eq.s32.totalorder %s13, 1
    %p73 = scmp.ne.s32.totalorder %s68, %s70
    %p74 = scmp.eq.s32.totalorder %s13, 0
    %p75 = por %p73, %p74
    %p76 = scmp.ne.s32.totalorder %s68, %s70
    %p77 = scmp.eq.s32.totalorder %s18, 1
    %p78 = por %p76, %p77
    %p79 = scmp.ne.s32.totalorder %s70, %s71
    %p80 = scmp.eq.s32.totalorder %s18, 0
    %p81 = por %p79, %p80
    %p82 = scmp.ne.s32.totalorder %s70, %s71
    %p83 = scmp.eq.s32.totalorder %s19, 1
    %p84 = por %p82, %p83
    %p86 = scmp.ne.s32.totalorder %s71, %s85
    %p87 = scmp.eq.s32.totalorder %s19, 0
    %p88 = por %p86, %p87
    %s90 = sadd.s32 %s89, 1
    %p93 = scmp.eq.s32.totalorder %s13, 1
    %p94 = scmp.ne.s32.totalorder %s89, %s91
    %p95 = scmp.eq.s32.totalorder %s13, 0
    %p96 = por %p94, %p95
    %p97 = scmp.ne.s32.totalorder %s89, %s91
    %p98 = scmp.eq.s32.totalorder %s18, 1
    %p99 = por %p97, %p98
    %p100 = scmp.ne.s32.totalorder %s91, %s92
    %p101 = scmp.eq.s32.totalorder %s18, 0
    %p102 = por %p100, %p101
    %p103 = scmp.ne.s32.totalorder %s91, %s92
    %p104 = scmp.eq.s32.totalorder %s19, 1
    %p105 = por %p103, %p104
    %p107 = scmp.ne.s32.totalorder %s92, %s106
    %p108 = scmp.eq.s32.totalorder %s19, 0
    %p109 = por %p107, %p108
    %s111 = sadd.s32 %s110, 1
    %p114 = scmp.eq.s32.totalorder %s13, 1
    %p115 = scmp.ne.s32.totalorder %s110, %s112
    %p116 = scmp.eq.s32.totalorder %s13, 0
    %p117 = por %p115, %p116
    %p118 = scmp.ne.s32.totalorder %s110, %s112
    %p119 = scmp.eq.s32.totalorder %s18, 1
    %p120 = por %p118, %p119
    %p121 = scmp.ne.s32.totalorder %s112, %s113
    %p122 = scmp.eq.s32.totalorder %s18, 0
    %p123 = por %p121, %p122
    %p124 = scmp.ne.s32.totalorder %s112, %s113
    %p125 = scmp.eq.s32.totalorder %s19, 1
    %p126 = por %p124, %p125
    %p128 = scmp.ne.s32.totalorder %s113, %s127
    %p129 = scmp.eq.s32.totalorder %s19, 0
    %p130 = por %p128, %p129
    %s132 = sadd.s32 %s131, 1
    %p135 = scmp.eq.s32.totalorder %s13, 1
    %p136 = scmp.ne.s32.totalorder %s131, %s133
    %p137 = scmp.eq.s32.totalorder %s13, 0
    %p138 = por %p136, %p137
    %p139 = scmp.ne.s32.totalorder %s131, %s133
    %p140 = scmp.eq.s32.totalorder %s18, 1
    %p141 = por %p139, %p140
    %p142 = scmp.ne.s32.totalorder %s133, %s134
    %p143 = scmp.eq.s32.totalorder %s18, 0
    %p144 = por %p142, %p143
    %p145 = scmp.ne.s32.totalorder %s133, %s134
    %p146 = scmp.eq.s32.totalorder %s19, 1
    %p147 = por %p145, %p146
    %p149 = scmp.ne.s32.totalorder %s134, %s148
    %p150 = scmp.eq.s32.totalorder %s19, 0
    %p151 = por %p149, %p150
    %s153 = sadd.s32 %s152, 1
    %p156 = scmp.eq.s32.totalorder %s13, 1
    %p157 = scmp.ne.s32.totalorder %s152, %s154
    %p158 = scmp.eq.s32.totalorder %s13, 0
    %p159 = por %p157, %p158
    %p160 = scmp.ne.s32.totalorder %s152, %s154
    %p161 = scmp.eq.s32.totalorder %s18, 1
    %p162 = por %p160, %p161
    %p163 = scmp.ne.s32.totalorder %s154, %s155
    %p164 = scmp.eq.s32.totalorder %s18, 0
    %p165 = por %p163, %p164
    %p166 = scmp.ne.s32.totalorder %s154, %s155
    %p167 = scmp.eq.s32.totalorder %s19, 1
    %p168 = por %p166, %p167
    %p170 = scmp.ne.s32.totalorder %s155, %s169
    %p171 = scmp.eq.s32.totalorder %s19, 0
    %p172 = por %p170, %p171
    %s173 = ssub.s32 %s13, %s20
    %p174 = scmp.eq.s32.totalorder %s173, 0
    %s176 = sadd.s32 %s175, 1
    %s177 = scalar_select %p174, %s175, %s176
    %p180 = pneg %p174
    %p181 = scmp.eq.s32.totalorder %s13, 1
    %p182 = por %p180, %p181
    %p183 = scmp.ne.s32.totalorder %s175, %s178
    %p184 = scmp.eq.s32.totalorder %s13, 0
    %p185 = por %p183, %p184
    %p186 = scmp.ne.s32.totalorder %s175, %s178
    %p187 = scmp.eq.s32.totalorder %s18, 1
    %p188 = por %p186, %p187
    %p189 = scmp.ne.s32.totalorder %s178, %s179
    %p190 = scmp.eq.s32.totalorder %s18, 0
    %p191 = por %p189, %p190
    %p192 = scmp.ne.s32.totalorder %s178, %s179
    %p193 = scmp.eq.s32.totalorder %s19, 1
    %p194 = por %p192, %p193
    %p196 = scmp.ne.s32.totalorder %s179, %s195
    %p197 = scmp.eq.s32.totalorder %s19, 0
    %p198 = por %p196, %p197
    %p199 = scmp.le.s32.totalorder 1, %s13
    %p200 = scmp.lt.s32.totalorder %s13, 3
    %p201 = pnand %p199, %p200
    %p202 = pneg %p201
    // Predicated region
    $region9: #{mlp_forward.1} parent=5 // pred_check
      _
    $region10: #{mlp_forward.1} parent=5 // pred_check_branch
      %204 = sbr.rel (%p201) target = $region12
    $region11: #{mlp_forward.1} parent=5 // pred_region
      %s205 = ssub.s32 %s13, 1
      // Predicated region
      $region13: #{mlp_forward.1} parent=11 // pred_check
        %p206 = pneg %p60
      $region14: #{mlp_forward.1} parent=11 // pred_check_branch
        %208 = sbr.rel (%p206) target = $region16
      $region15: #{mlp_forward.1} parent=11 // pred_region
        _
      $region16: #{mlp_forward.1} parent=11 // pred_fallthru
        _
      // Predicated region
      $region17: #{mlp_forward.1} parent=11 // pred_check
        %p209 = pneg %p81
      $region18: #{mlp_forward.1} parent=11 // pred_check_branch
        %211 = sbr.rel (%p209) target = $region20
      $region19: #{mlp_forward.1} parent=11 // pred_region
        _
      $region20: #{mlp_forward.1} parent=11 // pred_fallthru
        _
      // Predicated region
      $region21: #{mlp_forward.1} parent=11 // pred_check
        %p212 = pneg %p102
      $region22: #{mlp_forward.1} parent=11 // pred_check_branch
        %214 = sbr.rel (%p212) target = $region24
      $region23: #{mlp_forward.1} parent=11 // pred_region
        _
      $region24: #{mlp_forward.1} parent=11 // pred_fallthru
        _
      // Predicated region
      $region25: #{mlp_forward.1} parent=11 // pred_check
        %p215 = pneg %p123
      $region26: #{mlp_forward.1} parent=11 // pred_check_branch
        %217 = sbr.rel (%p215) target = $region28
      $region27: #{mlp_forward.1} parent=11 // pred_region
        _
      $region28: #{mlp_forward.1} parent=11 // pred_fallthru
        _
      // Predicated region
      $region29: #{mlp_forward.1} parent=11 // pred_check
        %p218 = pneg %p144
      $region30: #{mlp_forward.1} parent=11 // pred_check_branch
        %220 = sbr.rel (%p218) target = $region32
      $region31: #{mlp_forward.1} parent=11 // pred_region
        _
      $region32: #{mlp_forward.1} parent=11 // pred_fallthru
        _
      // Predicated region
      $region33: #{mlp_forward.1} parent=11 // pred_check
        %p221 = pneg %p165
      $region34: #{mlp_forward.1} parent=11 // pred_check_branch
        %223 = sbr.rel (%p221) target = $region36
      $region35: #{mlp_forward.1} parent=11 // pred_region
        _
      $region36: #{mlp_forward.1} parent=11 // pred_fallthru
        _
    $region12: #{mlp_forward.1} parent=5 // pred_fallthru
      _
    %p224 = scmp.lt.s32.totalorder %s13, 2
    // Predicated region
    $region37: #{mlp_forward.1} parent=5 // pred_check
      %p225 = pneg %p224
    $region38: #{mlp_forward.1} parent=5 // pred_check_branch
      %227 = sbr.rel (%p225) target = $region40
    $region39: #{mlp_forward.1} parent=5 // pred_region
      // Predicated region
      $region41: #{mlp_forward.1} parent=39 // pred_check
        %p228 = pneg %p33
      $region42: #{mlp_forward.1} parent=39 // pred_check_branch
        %230 = sbr.rel (%p228) target = $region44
      $region43: #{mlp_forward.1} parent=39 // pred_region
        %p231 = scmp.lt.s32.totalorder %s13, 1
        %s232 = scalar_select %p231, %s13, 1
        %s233 = smul.addr %s232, 8
        %s234 = scalar_lea.vmem %s0, %s233
      $region44: #{mlp_forward.1} parent=39 // pred_fallthru
        _
    $region40: #{mlp_forward.1} parent=5 // pred_fallthru
      _
    %p235 = scmp.le.s32.totalorder 1, %s13
    %p236 = scmp.lt.s32.totalorder %s13, 3
    %p237 = pnand %p235, %p236
    %p238 = pneg %p237
    // Predicated region
    $region45: #{mlp_forward.1} parent=5 // pred_check
      _
    $region46: #{mlp_forward.1} parent=5 // pred_check_branch
      %240 = sbr.rel (%p237) target = $region48
    $region47: #{mlp_forward.1} parent=5 // pred_region
      %s241 = ssub.s32 %s13, 1
      %p242 = scmp.lt.s32.totalorder %s18, 1
      %s243 = scalar_select %p242, %s18, 1
      %s244 = smul.addr %s243, 8
      %s245 = scalar_lea.vmem %s0, %s244
      %p246 = pneg %p39
      %p247 = pneg %p36
      %p248 = pneg %p60
      %p249 = pneg %p57
      %p250 = pneg %p81
      %p251 = pneg %p78
      %p252 = pneg %p102
      %p253 = pneg %p99
      %p254 = pneg %p123
      %p255 = pneg %p120
      %p256 = pneg %p144
      %p257 = pneg %p141
      %p258 = pneg %p165
      %p259 = pneg %p162
      %p260 = pneg %p191
      %p261 = pneg %p188
      %p262 = scmp.lt.s32.totalorder %s18, 1
      %s263 = scalar_select %p262, %s18, 1
      %s264 = smul.addr %s263, 8
      %s265 = scalar_lea.vmem %s7, %s264
      %p266 = scmp.lt.s32.totalorder %s18, 1
      %s267 = scalar_select %p266, %s18, 1
      %s268 = smul.addr %s267, 8
      %s269 = scalar_lea.vmem %s0, %s268
      %p270 = scmp.lt.s32.totalorder %s18, 1
      %s271 = scalar_select %p270, %s18, 1
      %s272 = smul.addr %s271, 8
      %s273 = scalar_lea.vmem %s7, %s272
      %v275 = vld [vmem:[%s269] sm:$0xff]
      %v276 = vpack.c.bf16 %v275, %v275
      %v277 = vld [vmem:[%s1] sm:$0xf]
      %v278 = vld [vmem:[%s1 + $0x4] sm:$0xf]
      %v279 = vld [vmem:[%s1 + $0x8] sm:$0xf]
      %v280 = vld [vmem:[%s1 + $0xc] sm:$0xf]
      %v281 = vld [vmem:[%s2] sm:$0x1]
      %v283 = vperm.slane %v281, 0
      %v289 = vunpack.c.l.b16 %v277
      %v290 = vunpack.c.l.b16 %v278
      %v291 = vunpack.c.l.b16 %v279
      %v292 = vunpack.c.l.b16 %v280
      %v293 = vpack.c.b16 %v290, %v289
      %v294 = vpack.c.b16 %v292, %v291
      %vm297 = vcmask 261120
      %v299 = vsel %vm297, %v276, 0
      %301 = vmatpush.bf16.msra.mxu0 0
      %302 = vmatpush.bf16.msra.mxu0 0
      %303 = vmatpush.bf16.msra.mxu0 0
      %304 = vmatpush.bf16.msra.mxu0 0
      %305 = vmatpush.bf16.msra.mxu0 0
      %306 = vmatpush.bf16.msra.mxu0 0
      %307 = vmatpush.bf16.msra.mxu0 %v294
      %308 = vmatpush.bf16.msra.mxu0 %v293
      %309 = vmatmul.bf16.gmra.mxu0 %v299
      %v310 = vpop.f32.mrf.mxu0
      %v311 = vadd.f32 %v283, %v310
      %v312 = vpop.f32.mrf.mxu0
      %313 = vdwg.mxu0
      %v314 = vmax.f32 %v311, 0.0
      %v315 = vpack.c.bf16 %v314, %v314
      %v316 = vld [vmem:[%s3] sm:$0xf]
      %v317 = vld [vmem:[%s3 + $0x4] sm:$0xf]
      %v318 = vld [vmem:[%s3 + $0x8] sm:$0xf]
      %v319 = vld [vmem:[%s3 + $0xc] sm:$0xf]
      %v320 = vld [vmem:[%s3 + $0x10] sm:$0xf]
      %v321 = vld [vmem:[%s3 + $0x14] sm:$0xf]
      %v322 = vld [vmem:[%s3 + $0x18] sm:$0xf]
      %v323 = vld [vmem:[%s3 + $0x1c] sm:$0xf]
      %v324 = vld [vmem:[%s3 + $0x20] sm:$0xf]
      %v325 = vld [vmem:[%s3 + $0x24] sm:$0xf]
      %v326 = vld [vmem:[%s3 + $0x28] sm:$0xf]
      %v327 = vld [vmem:[%s3 + $0x2c] sm:$0xf]
      %v328 = vld [vmem:[%s3 + $0x30] sm:$0xf]
      %v329 = vld [vmem:[%s3 + $0x34] sm:$0xf]
      %v330 = vld [vmem:[%s3 + $0x38] sm:$0xf]
      %v331 = vld [vmem:[%s3 + $0x3c] sm:$0xf]
      %v332 = vld [vmem:[%s4] sm:$0x1]
      %v334 = vperm.slane %v332, 0
      %v352 = vunpack.c.l.b16 %v316
      %v353 = vunpack.c.l.b16 %v317
      %v354 = vunpack.c.l.b16 %v318
      %v355 = vunpack.c.l.b16 %v319
      %v356 = vunpack.c.l.b16 %v320
      %v357 = vunpack.c.l.b16 %v321
      %v358 = vunpack.c.l.b16 %v322
      %v359 = vunpack.c.l.b16 %v323
      %v360 = vunpack.c.l.b16 %v324
      %v361 = vunpack.c.l.b16 %v325
      %v362 = vunpack.c.l.b16 %v326
      %v363 = vunpack.c.l.b16 %v327
      %v364 = vunpack.c.l.b16 %v328
      %v365 = vunpack.c.l.b16 %v329
      %v366 = vunpack.c.l.b16 %v330
      %v367 = vunpack.c.l.b16 %v331
      %v368 = vpack.c.b16 %v353, %v352
      %v369 = vpack.c.b16 %v355, %v354
      %v370 = vpack.c.b16 %v357, %v356
      %v371 = vpack.c.b16 %v359, %v358
      %v372 = vpack.c.b16 %v361, %v360
      %v373 = vpack.c.b16 %v363, %v362
      %v374 = vpack.c.b16 %v365, %v364
      %v375 = vpack.c.b16 %v367, %v366
      %384 = vmatpush.bf16.msra.mxu0 %v375
      %385 = vmatpush.bf16.msra.mxu0 %v374
      %386 = vmatpush.bf16.msra.mxu0 %v373
      %387 = vmatpush.bf16.msra.mxu0 %v372
      %388 = vmatpush.bf16.msra.mxu0 %v371
      %389 = vmatpush.bf16.msra.mxu0 %v370
      %390 = vmatpush.bf16.msra.mxu0 %v369
      %391 = vmatpush.bf16.msra.mxu0 %v368
      %392 = vmatmul.bf16.gmra.mxu0 %v315
      %v393 = vpop.f32.mrf.mxu0
      %v394 = vadd.f32 %v334, %v393
      %v395 = vpop.f32.mrf.mxu0
      %396 = vdwg.mxu0
      %v397 = vmax.f32 %v394, 0.0
      %v398 = vpack.c.bf16 %v397, %v397
      %v399 = vld [vmem:[%s5] sm:$0xf]
      %v400 = vld [vmem:[%s5 + $0x4] sm:$0xf]
      %v401 = vld [vmem:[%s5 + $0x8] sm:$0xf]
      %v402 = vld [vmem:[%s5 + $0xc] sm:$0xf]
      %v403 = vld [vmem:[%s5 + $0x10] sm:$0xf]
      %v404 = vld [vmem:[%s5 + $0x14] sm:$0xf]
      %v405 = vld [vmem:[%s5 + $0x18] sm:$0xf]
      %v406 = vld [vmem:[%s5 + $0x1c] sm:$0xf]
      %v407 = vld [vmem:[%s6] sm:$0x1]
      %v409 = vperm.slane %v407, 0
      %v419 = vunpack.c.l.b16 %v399
      %v420 = vunpack.c.l.b16 %v400
      %v421 = vunpack.c.l.b16 %v401
      %v422 = vunpack.c.l.b16 %v402
      %v423 = vunpack.c.l.b16 %v403
      %v424 = vunpack.c.l.b16 %v404
      %v425 = vunpack.c.l.b16 %v405
      %v426 = vunpack.c.l.b16 %v406
      %v427 = vpack.c.b16 %v420, %v419
      %v428 = vpack.c.b16 %v422, %v421
      %v429 = vpack.c.b16 %v424, %v423
      %v430 = vpack.c.b16 %v426, %v425
      %vm435 = vcmask 523264
      %v437 = vsel %vm435, %v398, 0
      %439 = vmatpush.bf16.msra.mxu0 0
      %440 = vmatpush.bf16.msra.mxu0 0
      %441 = vmatpush.bf16.msra.mxu0 0
      %442 = vmatpush.bf16.msra.mxu0 0
      %443 = vmatpush.bf16.msra.mxu0 %v430
      %444 = vmatpush.bf16.msra.mxu0 %v429
      %445 = vmatpush.bf16.msra.mxu0 %v428
      %446 = vmatpush.bf16.msra.mxu0 %v427
      %447 = vmatmul.bf16.gmra.mxu0 %v437
      %v448 = vpop.f32.mrf.mxu0
      %v449 = vadd.f32 %v409, %v448
      %v450 = vpop.f32.mrf.mxu0
      %451 = vdwg.mxu0
      %vm452 = vcmask 23552
      %453 = vst.msk [vmem:[%s273] sm:$0xff] %vm452, %v449
      %p454 = scmp.lt.s32.totalorder %s18, 1
      %s455 = scalar_select %p454, %s18, 1
      %s456 = smul.addr %s455, 8
      %s457 = scalar_lea.vmem %s7, %s456
      // Predicated region
      $region49: #{mlp_forward.1} parent=47 // pred_check
        %p458 = pneg %p188
      $region50: #{mlp_forward.1} parent=47 // pred_check_branch
        %460 = sbr.rel (%p458) target = $region52
      $region51: #{mlp_forward.1} parent=47 // pred_region
        _
      $region52: #{mlp_forward.1} parent=47 // pred_fallthru
        _
    $region48: #{mlp_forward.1} parent=5 // pred_fallthru
      _
    %p461 = scmp.le.s32.totalorder 2, %s13
    // Predicated region
    $region53: #{mlp_forward.1} parent=5 // pred_check
      %p462 = pneg %p461
    $region54: #{mlp_forward.1} parent=5 // pred_check_branch
      %464 = sbr.rel (%p462) target = $region56
    $region55: #{mlp_forward.1} parent=5 // pred_region
      %s465 = ssub.s32 %s13, 2
      // Predicated region
      $region57: #{mlp_forward.1} parent=55 // pred_check
        %p466 = pneg %p194
      $region58: #{mlp_forward.1} parent=55 // pred_check_branch
        %468 = sbr.rel (%p466) target = $region60
      $region59: #{mlp_forward.1} parent=55 // pred_region
        %p469 = scmp.lt.s32.totalorder %s19, 1
        %s470 = scalar_select %p469, %s19, 1
        %s471 = smul.addr %s470, 8
        %s472 = scalar_lea.vmem %s7, %s471
      $region60: #{mlp_forward.1} parent=55 // pred_fallthru
        _
    $region56: #{mlp_forward.1} parent=5 // pred_fallthru
      _
  $region6: #{mlp_forward.1} parent=0 // loop_footer
    %s17 = sadd.s32 1, %s13
  $region7: #{mlp_forward.1} parent=0 // loop_footer_branch
    %12 = sbr.rel target = $region3
  $region8: #{mlp_forward.1} parent=0 // loop_exit
    _

</llo_original>
